<compile_context>
chip_gen: v6e
topology: v6e:2x2x1
jax: 0.10.0
libtpu: 0.0.40
codegen_flags: <defaults>
</compile_context>

<pallas_src>
import jax
import jax.numpy as jnp
from jax.experimental import pallas as pl
from jax.experimental.pallas import tpu as pltpu


def _round_up(x, m):
    return ((x + m - 1) // m) * m


def _approx_gelu_kernel(x_ref, w_ref, b_ref, o_ref, acc_ref):
    k = pl.program_id(2)

    @pl.when(k == 0)
    def _():
        acc_ref[...] = jnp.zeros_like(acc_ref)

    # MXU matmul, f32 accumulation.
    acc_ref[...] += jnp.dot(
        x_ref[...], w_ref[...], preferred_element_type=jnp.float32
    )

    @pl.when(k == pl.num_programs(2) - 1)
    def _():
        y = acc_ref[...] + b_ref[...]  # b_ref is (1, tile_n) f32, broadcasts over rows
        # x * sigmoid(1.702 x); exp + approximate reciprocal both land on the EUP slot.
        gate = pl.reciprocal(1.0 + jnp.exp(-1.702 * y), approx=True)
        o_ref[...] = (y * gate).astype(o_ref.dtype)


def approximate_gelu(x, w, b, *, tile_m=None, tile_n=None, tile_k=None,
                     compute_dtype=None, out_dtype=None):
    """x: (..., dim_in), w: (dim_in, dim_out), b: (dim_out,)."""
    orig_shape = x.shape
    dim_in = orig_shape[-1]
    dim_out = w.shape[1]
    out_dtype = out_dtype if out_dtype is not None else x.dtype

    x2d = x.reshape(-1, dim_in)
    M = x2d.shape[0]

    if compute_dtype is not None:
        x2d = x2d.astype(compute_dtype)
        w = w.astype(compute_dtype)
    in_dtype = x2d.dtype
    row_align = 16 if jnp.dtype(in_dtype).itemsize == 2 else 8

    # --- tile_m: bounded row tile; ensure >= 2 grid steps along M when possible (v7x). ---
    if tile_m is None:
        tile_m = min(512, _round_up(M, row_align))
        if _round_up(M, tile_m) // tile_m < 2 and M > row_align:
            tile_m = max(row_align, _round_up(-(-M // 2), row_align))
    Mp = _round_up(M, tile_m)

    # --- tile_n: lane-dense (multiple of 128) when dim_out allows. ---
    if tile_n is None:
        tile_n = dim_out if dim_out <= 128 else 256
    Np = _round_up(dim_out, tile_n)

    # --- tile_k: single block for modest dim_in, else K-tiling with accumulator. ---
    if tile_k is None:
        tile_k = dim_in if dim_in <= 1024 else 512
    Kp = _round_up(dim_in, tile_k)

    # Zero-pad to the tiled shapes (padded K columns contribute 0; padded M/N sliced off).
    if (Mp, Kp) != (M, dim_in):
        x2d = jnp.pad(x2d, ((0, Mp - M), (0, Kp - dim_in)))
    wp = w
    if (Kp, Np) != (dim_in, dim_out):
        wp = jnp.pad(w, ((0, Kp - dim_in), (0, Np - dim_out)))
    b2d = b.reshape(1, dim_out).astype(jnp.float32)
    if Np != dim_out:
        b2d = jnp.pad(b2d, ((0, 0), (0, Np - dim_out)))

    grid = (Mp // tile_m, Np // tile_n, Kp // tile_k)

    # Explicit VMEM budget: double-buffered inputs/outputs + f32 accumulator, 2x headroom,
    # capped safely below v7x's 64 MiB physical VMEM.
    itm_in = jnp.dtype(in_dtype).itemsize
    itm_out = jnp.dtype(out_dtype).itemsize
    est = (2 * (tile_m * tile_k + tile_k * tile_n) * itm_in
           + 2 * tile_n * 4
           + 2 * tile_m * tile_n * itm_out
           + tile_m * tile_n * 4)
    vmem_limit = int(min(56 << 20, max(16 << 20, 2 * est)))

    out = pl.pallas_call(
        _approx_gelu_kernel,
        out_shape=jax.ShapeDtypeStruct((Mp, Np), out_dtype),
        grid_spec=pltpu.PrefetchScalarGridSpec(
            num_scalar_prefetch=0,
            grid=grid,
            in_specs=[
                pl.BlockSpec((tile_m, tile_k), lambda i, j, k: (i, k)),
                pl.BlockSpec((tile_k, tile_n), lambda i, j, k: (k, j)),
                pl.BlockSpec((1, tile_n), lambda i, j, k: (0, j)),
            ],
            out_specs=pl.BlockSpec((tile_m, tile_n), lambda i, j, k: (i, j)),
            scratch_shapes=[pltpu.VMEM((tile_m, tile_n), jnp.float32)],
        ),
        compiler_params=pltpu.CompilerParams(
            dimension_semantics=("parallel", "parallel", "arbitrary"),
            vmem_limit_bytes=vmem_limit,
        ),
    )(x2d, wp, b2d)

    out = out[:M, :dim_out]
    return out.reshape(*orig_shape[:-1], dim_out)


if __name__ == "__main__":
    # ApproximateGELU(dim_in=32, dim_out=64) on input (batch=2, seq=8, dim_in=32)
    dim_in, dim_out = 32, 64
    batch, seq = 2, 8

    key = jax.random.PRNGKey(0)
    kx, kw, kb = jax.random.split(key, 3)

    x = jax.random.normal(kx, (batch, seq, dim_in), dtype=jnp.float32)
    # Deterministic synthetic parameters (nn.Linear: W_pt (dim_out, dim_in), b (dim_out,));
    # the weight is stored pre-transposed as (dim_in, dim_out).
    w = jax.random.normal(kw, (dim_in, dim_out), dtype=jnp.float32) * 0.05
    b = jax.random.normal(kb, (dim_out,), dtype=jnp.float32) * 0.05

    out = approximate_gelu(x, w, b)
    out = jax.block_until_ready(out)

    # Reference (same math as the PyTorch module).
    y_ref = x @ w + b
    ref = y_ref * jax.nn.sigmoid(1.702 * y_ref)
    assert out.shape == (batch, seq, dim_out)
    # Slightly relaxed tolerance: the epilogue uses the EUP approximate reciprocal.
    assert jnp.allclose(out, ref, atol=5e-3, rtol=5e-3), float(jnp.max(jnp.abs(out - ref)))

    print("KERNEL_OK")
</pallas_src>

<mosaic_0001>
module attributes {stable_mosaic.version = 11 : i64} {
  func.func @_approx_gelu_kernel(%arg0: i32, %arg1: i32, %arg2: i32, %arg3: memref<8x32xf32, #tpu.memory_space<vmem>>, %arg4: memref<32x64xf32, #tpu.memory_space<vmem>>, %arg5: memref<1x64xf32, #tpu.memory_space<vmem>>, %arg6: memref<8x64xf32, #tpu.memory_space<vmem>>, %arg7: memref<8x64xf32, #tpu.memory_space<vmem>>) attributes {dimension_semantics = [#tpu.dimension_semantics<parallel>, #tpu.dimension_semantics<parallel>, #tpu.dimension_semantics<arbitrary>], iteration_bounds = array<i64: 2, 1, 1>, scalar_prefetch = 0 : i64, scratch_operands = 1 : i64, tpu.core_type = #tpu.core_type<tc>, window_params = [{transform_indices = @transform_0, window_bounds = array<i64: 8, 32>}, {transform_indices = @transform_1, window_bounds = array<i64: 32, 64>}, {transform_indices = @transform_2, window_bounds = array<i64: 1, 64>}, {transform_indices = @transform_3, window_bounds = array<i64: 8, 64>}]} {
    %c0_i32 = arith.constant 0 : i32
    %0 = arith.cmpi eq, %arg2, %c0_i32 : i32
    %1 = arith.extui %0 : i1 to i32
    %c0_i32_0 = arith.constant 0 : i32
    %2 = arith.cmpi ne, %1, %c0_i32_0 : i32
    scf.if %2 {
      %cst_10 = arith.constant 0.000000e+00 : f32
      %12 = vector.broadcast %cst_10 : f32 to vector<8x64xf32>
      %c0_11 = arith.constant 0 : index
      %c0_12 = arith.constant 0 : index
      %13 = vector.load %arg7[%c0_11, %c0_12] : memref<8x64xf32, #tpu.memory_space<vmem>>, vector<8x64xf32>
      tpu.vector_store %arg7[%c0_11, %c0_12], %12 {strides = array<i32>} : memref<8x64xf32, #tpu.memory_space<vmem>>, vector<8x64xf32>,
    } else {
    }
    %c0 = arith.constant 0 : index
    %c0_1 = arith.constant 0 : index
    %3 = vector.load %arg7[%c0, %c0_1] : memref<8x64xf32, #tpu.memory_space<vmem>>, vector<8x64xf32>
    %c0_2 = arith.constant 0 : index
    %c0_3 = arith.constant 0 : index
    %4 = vector.load %arg3[%c0_2, %c0_3] : memref<8x32xf32, #tpu.memory_space<vmem>>, vector<8x32xf32>
    %c0_4 = arith.constant 0 : index
    %c0_5 = arith.constant 0 : index
    %5 = vector.load %arg4[%c0_4, %c0_5] : memref<32x64xf32, #tpu.memory_space<vmem>>, vector<32x64xf32>
    %cst = arith.constant dense<0.000000e+00> : vector<8x64xf32>
    %6 = tpu.matmul %4, %5, %cst {dimension_numbers = #tpu.dot_dimension_numbers<[1], [0], [0], [1], [0, 0, 1, 1], [], []>} : vector<8x32xf32>, vector<32x64xf32>, vector<8x64xf32> -> vector<8x64xf32>
    %7 = arith.addf %3, %6 : vector<8x64xf32>
    %c0_6 = arith.constant 0 : index
    %c0_7 = arith.constant 0 : index
    %8 = vector.load %arg7[%c0_6, %c0_7] : memref<8x64xf32, #tpu.memory_space<vmem>>, vector<8x64xf32>
    tpu.vector_store %arg7[%c0_6, %c0_7], %7 {strides = array<i32>} : memref<8x64xf32, #tpu.memory_space<vmem>>, vector<8x64xf32>,
    %c0_i32_8 = arith.constant 0 : i32
    %9 = arith.cmpi eq, %arg2, %c0_i32_8 : i32
    %10 = arith.extui %9 : i1 to i32
    %c0_i32_9 = arith.constant 0 : i32
    %11 = arith.cmpi ne, %10, %c0_i32_9 : i32
    scf.if %11 {
      %c0_10 = arith.constant 0 : index
      %c0_11 = arith.constant 0 : index
      %12 = vector.load %arg7[%c0_10, %c0_11] : memref<8x64xf32, #tpu.memory_space<vmem>>, vector<8x64xf32>
      %c0_12 = arith.constant 0 : index
      %c0_13 = arith.constant 0 : index
      %13 = vector.load %arg5[%c0_12, %c0_13] : memref<1x64xf32, #tpu.memory_space<vmem>>, vector<1x64xf32>
      %14 = vector.broadcast %13 : vector<1x64xf32> to vector<8x64xf32>
      %15 = arith.addf %12, %14 : vector<8x64xf32>
      %cst_14 = arith.constant -1.702000e+00 : f32
      %16 = vector.broadcast %cst_14 : f32 to vector<8x64xf32>
      %17 = arith.mulf %16, %15 : vector<8x64xf32>
      %18 = math.exp %17 : vector<8x64xf32>
      %cst_15 = arith.constant 1.000000e+00 : f32
      %19 = vector.broadcast %cst_15 : f32 to vector<8x64xf32>
      %20 = arith.addf %19, %18 : vector<8x64xf32>
      %21 = tpu.reciprocal %20 {approx = true} : vector<8x64xf32> -> vector<8x64xf32>
      %22 = arith.mulf %15, %21 : vector<8x64xf32>
      %c0_16 = arith.constant 0 : index
      %c0_17 = arith.constant 0 : index
      %23 = vector.load %arg6[%c0_16, %c0_17] : memref<8x64xf32, #tpu.memory_space<vmem>>, vector<8x64xf32>
      tpu.vector_store %arg6[%c0_16, %c0_17], %22 {strides = array<i32>} : memref<8x64xf32, #tpu.memory_space<vmem>>, vector<8x64xf32>,
    } else {
    }
    return
  }
  func.func @transform_0(%arg0: i32, %arg1: i32, %arg2: i32) -> (i32, i32) {
    %c0_i32 = arith.constant 0 : i32
    return %arg0, %arg2 : i32, i32
  }
  func.func @transform_1(%arg0: i32, %arg1: i32, %arg2: i32) -> (i32, i32) {
    %c0_i32 = arith.constant 0 : i32
    return %arg2, %arg1 : i32, i32
  }
  func.func @transform_2(%arg0: i32, %arg1: i32, %arg2: i32) -> (i32, i32) {
    %c0_i32 = arith.constant 0 : i32
    %c0_i32_0 = arith.constant 0 : i32
    return %c0_i32, %arg1 : i32, i32
  }
  func.func @transform_3(%arg0: i32, %arg1: i32, %arg2: i32) -> (i32, i32) {
    %c0_i32 = arith.constant 0 : i32
    return %arg0, %arg1 : i32, i32
  }
}

</mosaic_0001>

<llo_original>
// kernel: tpu_custom_call.1
$region0: #{tpu_custom_call.1}
  #allocation0 [shape = 'u32[]', space=smem, size = 0x4, offset = 0x4, fixed_abs, tag = 'smem constant byte address 0x4 - core index']
  #allocation1 [shape = 'u32[144,128]{1,0:T(1,128)}', space=vmem, size = 0x12000, scoped, tag = 'internal scratch']
  #allocation2 [shape = 'f32[8,64]{1,0:T(8,128)}', space=vmem, size = 0x1000, scoped, tag = 'scratch operand']
  %s0 = inlined_call_operand.hbm [shape: f32[16,32], index: 0, kind: input, shape index: {}]
  %s1 = inlined_call_operand.hbm [shape: f32[32,64], index: 1, kind: input, shape index: {}]
  %s2 = inlined_call_operand.vmem [shape: f32[1,64], index: 2, kind: input, shape index: {}]
  %s3 = inlined_call_operand.hbm [shape: f32[16,64], index: 3, kind: output, shape index: {}]
  %s4 = sld [smem:[#allocation0]]
  $region61: #{tpu_custom_call.1} parent=0
    _
  %s6 = ssub.s32 1, %s4
  %s7 = scalar_select 0, %s6, %s4
  $region1: #{tpu_custom_call.1} parent=0
    #allocation3 [shape = 'u8[8192]{0}', space=vmem, size = 0x2000, scoped, tag = 'input window, operand 0']
    #allocation4 [shape = 's32[2]{0}', space=sflag, size = 0x8, scoped, tag = 'scoped memory for tpu_custom_call.1']
    #allocation5 [shape = 's32[2]{0}', space=sflag, size = 0x8, scoped, tag = 'scoped memory for tpu_custom_call.1']
    #allocation6 [shape = 'u8[16384]{0}', space=vmem, size = 0x4000, scoped, tag = 'input window, operand 1, single buffered']
    #allocation7 [shape = 's32[1]{0}', space=sflag, size = 0x4, scoped, tag = 'scoped memory for tpu_custom_call.1']
    #allocation8 [shape = 'u8[8192]{0}', space=vmem, size = 0x2000, scoped, tag = 'output window, operand 0']
    %8 = vsyncpa [#allocation4], 0
    %s9 = scalar_lea.sflag [#allocation4], 1
    %10 = vsyncpa %s9, 0
    %11 = vsyncpa [#allocation7], 0
    %12 = vsyncpa [#allocation5], 0
    %s13 = scalar_lea.sflag [#allocation5], 1
    %14 = vsyncpa %s13, 0
    loop: start=0, step=1, limit=4
    $region2: #{tpu_custom_call.1} parent=1 // loop_pre_header
      _
    $region3: #{tpu_custom_call.1} parent=1 // loop_header
      %s16 = sphi 0, %s20
      %p17 = scmp.ge.s32.totalorder %s16, 4
      %s23 = sphi 0, %s42
      %s24 = sphi 0, %s38
      %s25 = sphi 0, %s34
      %s26 = sphi 0, %s23
      %s27 = sphi 0, %s24
      %s28 = sphi 0, %s25
      %s29 = sphi 0, %s26
      %s30 = sphi 0, %s27
      %s31 = sphi 0, %s28
      %s47 = sphi 0, %s49
      %s50 = sphi 0, %s47
      %s51 = sphi 0, %s50
      %s67 = sphi 0, %s51
      %s75 = sphi 0, %s77
      %s78 = sphi 0, %s75
      %s79 = sphi 0, %s78
      %s95 = sphi 0, %s79
      %s101 = sphi 0, %s103
      %s104 = sphi 0, %s101
      %s105 = sphi 0, %s104
      %s121 = sphi 0, %s105
      %s129 = sphi 0, %s131
      %s132 = sphi 0, %s129
      %s133 = sphi 0, %s132
      %s149 = sphi 0, %s133
    $region4: #{tpu_custom_call.1} parent=1 // loop_header_branch
      %19 = sbr.rel (%p17) target = $region8
    $region5: #{tpu_custom_call.1} parent=1 // loop_body
      %s21 = ssub.s32 %s16, 1
      %s22 = ssub.s32 %s16, 2
      %s32 = sadd.s32 1, %s25
      %p33 = scmp.ge.s32.totalorder %s32, 1
      %s34 = scalar_select %p33, 0, %s32
      %s35 = sadd.s32 1, %s24
      %s36 = scalar_select %p33, %s35, %s24
      %p37 = scmp.ge.s32.totalorder %s36, 1
      %s38 = scalar_select %p37, 0, %s36
      %s39 = sadd.s32 1, %s23
      %s40 = scalar_select %p37, %s39, %s23
      %p41 = scmp.ge.s32.totalorder %s40, 2
      %s42 = scalar_select %p41, 0, %s40
      %s43 = ssub.s32 %s23, %s42
      %s44 = ssub.s32 %s25, %s34
      %s45 = sor.u32 %s43, %s44
      %p46 = scmp.eq.s32.totalorder %s45, 0
      %s48 = sadd.s32 %s47, 1
      %s49 = scalar_select %p46, %s47, %s48
      %p52 = pneg %p46
      %p53 = scmp.eq.s32.totalorder %s16, 1
      %p54 = por %p52, %p53
      %p55 = scmp.ne.s32.totalorder %s47, %s50
      %p56 = scmp.eq.s32.totalorder %s16, 0
      %p57 = por %p55, %p56
      %p58 = scmp.ne.s32.totalorder %s47, %s50
      %p59 = scmp.eq.s32.totalorder %s21, 1
      %p60 = por %p58, %p59
      %p61 = scmp.ne.s32.totalorder %s50, %s51
      %p62 = scmp.eq.s32.totalorder %s21, 0
      %p63 = por %p61, %p62
      %p64 = scmp.ne.s32.totalorder %s50, %s51
      %p65 = scmp.eq.s32.totalorder %s22, 1
      %p66 = por %p64, %p65
      %p68 = scmp.ne.s32.totalorder %s51, %s67
      %p69 = scmp.eq.s32.totalorder %s22, 0
      %p70 = por %p68, %p69
      %s71 = ssub.s32 %s25, %s34
      %s72 = ssub.s32 %s24, %s38
      %s73 = sor.u32 %s71, %s72
      %p74 = scmp.eq.s32.totalorder %s73, 0
      %s76 = sadd.s32 %s75, 1
      %s77 = scalar_select %p74, %s75, %s76
      %p80 = pneg %p74
      %p81 = scmp.eq.s32.totalorder %s16, 1
      %p82 = por %p80, %p81
      %p83 = scmp.ne.s32.totalorder %s75, %s78
      %p84 = scmp.eq.s32.totalorder %s16, 0
      %p85 = por %p83, %p84
      %p86 = scmp.ne.s32.totalorder %s75, %s78
      %p87 = scmp.eq.s32.totalorder %s21, 1
      %p88 = por %p86, %p87
      %p89 = scmp.ne.s32.totalorder %s78, %s79
      %p90 = scmp.eq.s32.totalorder %s21, 0
      %p91 = por %p89, %p90
      %p92 = scmp.ne.s32.totalorder %s78, %s79
      %p93 = scmp.eq.s32.totalorder %s22, 1
      %p94 = por %p92, %p93
      %p96 = scmp.ne.s32.totalorder %s79, %s95
      %p97 = scmp.eq.s32.totalorder %s22, 0
      %p98 = por %p96, %p97
      %s99 = ssub.s32 %s24, %s38
      %p100 = scmp.eq.s32.totalorder %s99, 0
      %s102 = sadd.s32 %s101, 1
      %s103 = scalar_select %p100, %s101, %s102
      %p106 = pneg %p100
      %p107 = scmp.eq.s32.totalorder %s16, 1
      %p108 = por %p106, %p107
      %p109 = scmp.ne.s32.totalorder %s101, %s104
      %p110 = scmp.eq.s32.totalorder %s16, 0
      %p111 = por %p109, %p110
      %p112 = scmp.ne.s32.totalorder %s101, %s104
      %p113 = scmp.eq.s32.totalorder %s21, 1
      %p114 = por %p112, %p113
      %p115 = scmp.ne.s32.totalorder %s104, %s105
      %p116 = scmp.eq.s32.totalorder %s21, 0
      %p117 = por %p115, %p116
      %p118 = scmp.ne.s32.totalorder %s104, %s105
      %p119 = scmp.eq.s32.totalorder %s22, 1
      %p120 = por %p118, %p119
      %p122 = scmp.ne.s32.totalorder %s105, %s121
      %p123 = scmp.eq.s32.totalorder %s22, 0
      %p124 = por %p122, %p123
      %s125 = ssub.s32 %s23, %s42
      %s126 = ssub.s32 %s24, %s38
      %s127 = sor.u32 %s125, %s126
      %p128 = scmp.eq.s32.totalorder %s127, 0
      %s130 = sadd.s32 %s129, 1
      %s131 = scalar_select %p128, %s129, %s130
      %p134 = pneg %p128
      %p135 = scmp.eq.s32.totalorder %s16, 1
      %p136 = por %p134, %p135
      %p137 = scmp.ne.s32.totalorder %s129, %s132
      %p138 = scmp.eq.s32.totalorder %s16, 0
      %p139 = por %p137, %p138
      %p140 = scmp.ne.s32.totalorder %s129, %s132
      %p141 = scmp.eq.s32.totalorder %s21, 1
      %p142 = por %p140, %p141
      %p143 = scmp.ne.s32.totalorder %s132, %s133
      %p144 = scmp.eq.s32.totalorder %s21, 0
      %p145 = por %p143, %p144
      %p146 = scmp.ne.s32.totalorder %s132, %s133
      %p147 = scmp.eq.s32.totalorder %s22, 1
      %p148 = por %p146, %p147
      %p150 = scmp.ne.s32.totalorder %s133, %s149
      %p151 = scmp.eq.s32.totalorder %s22, 0
      %p152 = por %p150, %p151
      %p153 = scmp.le.s32.totalorder 1, %s16
      %p154 = scmp.lt.s32.totalorder %s16, 3
      %p155 = pnand %p153, %p154
      %p156 = pneg %p155
      // Predicated region
      $region9: #{tpu_custom_call.1} parent=5 // pred_check
        _
      $region10: #{tpu_custom_call.1} parent=5 // pred_check_branch
        %158 = sbr.rel (%p155) target = $region12
      $region11: #{tpu_custom_call.1} parent=5 // pred_region
        %s159 = ssub.s32 %s16, 1
        // Predicated region
        $region13: #{tpu_custom_call.1} parent=11 // pred_check
          %p160 = pneg %p91
        $region14: #{tpu_custom_call.1} parent=11 // pred_check_branch
          %162 = sbr.rel (%p160) target = $region16
        $region15: #{tpu_custom_call.1} parent=11 // pred_region
          %s163 = smul.u32 4, %s28
          %s165 = ssub.s32 512, 512
          %166 = vsyncadd [#allocation7], %s165
          %s167 = sadd.s32 %s27, %s163
          %s168 = smul.addr %s167, 128
          %s169 = scalar_lea.hbm %s1, %s168
          %s170 = sshll.u32 [#allocation6], 4
          %s171 = int_to_ptr.vmem [resolvable:$true] %s170
          %176 = dma.hbm_to_vmem [thread:$0]  %s169, 512, %s171, [#allocation7], 128, 128, 8
        $region16: #{tpu_custom_call.1} parent=11 // pred_fallthru
          _
        // Predicated region
        $region17: #{tpu_custom_call.1} parent=11 // pred_check
          %p177 = pneg %p117
        $region18: #{tpu_custom_call.1} parent=11 // pred_check_branch
          %179 = sbr.rel (%p177) target = $region20
        $region19: #{tpu_custom_call.1} parent=11 // pred_region
          %p180 = scmp.lt.s32.totalorder %s27, 0
          %s181 = scalar_select %p180, %s27, 0
          %s182 = scalar_lea.vmem %s2, %s181
        $region20: #{tpu_custom_call.1} parent=11 // pred_fallthru
          _
      $region12: #{tpu_custom_call.1} parent=5 // pred_fallthru
        _
      %p183 = scmp.lt.s32.totalorder %s16, 2
      // Predicated region
      $region21: #{tpu_custom_call.1} parent=5 // pred_check
        %p184 = pneg %p183
      $region22: #{tpu_custom_call.1} parent=5 // pred_check_branch
        %186 = sbr.rel (%p184) target = $region24
      $region23: #{tpu_custom_call.1} parent=5 // pred_region
        // Predicated region
        $region25: #{tpu_custom_call.1} parent=23 // pred_check
          %p187 = pneg %p57
        $region26: #{tpu_custom_call.1} parent=23 // pred_check_branch
          %189 = sbr.rel (%p187) target = $region28
        $region27: #{tpu_custom_call.1} parent=23 // pred_region
          %s190 = sand.u32 %s47, 1
          %s191 = scalar_lea.sflag [#allocation4], %s190
          %s192 = sand.u32 %s47, 1
          %s193 = smul.addr %s192, 8
          %s194 = scalar_lea.vmem [#allocation3], %s193
          %s196 = ssub.s32 128, 128
          %197 = vsyncadd %s191, %s196
          %s198 = sadd.s32 %s25, %s23
          %s199 = smul.addr %s198, 128
          %s200 = scalar_lea.hbm %s0, %s199
          %s202 = sshll.u32 %s194, 4
          %s203 = int_to_ptr.vmem [resolvable:$true] %s202
          %205 = dma.hbm_to_vmem [thread:$0]  %s200, 128, %s203, %s191
        $region28: #{tpu_custom_call.1} parent=23 // pred_fallthru
          _
      $region24: #{tpu_custom_call.1} parent=5 // pred_fallthru
        _
      %p206 = scmp.le.s32.totalorder 1, %s16
      %p207 = scmp.lt.s32.totalorder %s16, 3
      %p208 = pnand %p206, %p207
      %p209 = pneg %p208
      // Predicated region
      $region29: #{tpu_custom_call.1} parent=5 // pred_check
        _
      $region30: #{tpu_custom_call.1} parent=5 // pred_check_branch
        %211 = sbr.rel (%p208) target = $region32
      $region31: #{tpu_custom_call.1} parent=5 // pred_region
        %s212 = ssub.s32 %s16, 1
        %s213 = sand.u32 %s50, 1
        %s214 = scalar_lea.sflag [#allocation4], %s213
        %s215 = sand.u32 %s50, 1
        %s216 = smul.addr %s215, 8
        %s217 = scalar_lea.vmem [#allocation3], %s216
        // Predicated region
        $region33: #{tpu_custom_call.1} parent=31 // pred_check
          %p218 = pneg %p63
        $region34: #{tpu_custom_call.1} parent=31 // pred_check_branch
          %220 = sbr.rel (%p218) target = $region36
        $region35: #{tpu_custom_call.1} parent=31 // pred_region
          %221 = dma.done %s214, 128
        $region36: #{tpu_custom_call.1} parent=31 // pred_fallthru
          _
        // Predicated region
        $region37: #{tpu_custom_call.1} parent=31 // pred_check
          %p222 = pneg %p91
        $region38: #{tpu_custom_call.1} parent=31 // pred_check_branch
          %224 = sbr.rel (%p222) target = $region40
        $region39: #{tpu_custom_call.1} parent=31 // pred_region
          %225 = dma.done [#allocation7], 512
        $region40: #{tpu_custom_call.1} parent=31 // pred_fallthru
          _
        %s226 = sand.u32 %s50, 1
        %s227 = scalar_lea.sflag [#allocation4], %s226
        %s228 = sand.u32 %s50, 1
        %s229 = smul.addr %s228, 8
        %s230 = scalar_lea.vmem [#allocation3], %s229
        %p231 = pneg %p63
        %p232 = pneg %p60
        %p233 = pneg %p91
        %p234 = pneg %p88
        %p235 = scmp.lt.s32.totalorder %s27, 0
        %s236 = scalar_select %p235, %s27, 0
        %s237 = scalar_lea.vmem %s2, %s236
        %p238 = pneg %p117
        %p239 = pneg %p114
        %p240 = pneg %p145
        %p241 = pneg %p142
        %s242 = sand.u32 %s132, 1
        %s243 = scalar_lea.sflag [#allocation5], %s242
        %s244 = sand.u32 %s132, 1
        %s245 = smul.addr %s244, 8
        %s246 = scalar_lea.vmem [#allocation8], %s245
        %s247 = smul.u32 4, %s28
        %p248 = scmp.lt.s32.totalorder %s27, 0
        %s249 = scalar_select %p248, %s27, 0
        %s250 = scalar_lea.vmem %s2, %s249
        %p251 = scmp.eq.s32.totalorder %s28, 0
        // Predicated region
        $region41: #{tpu_custom_call.1} parent=31 // pred_check
          %p252 = pneg %p251
        $region42: #{tpu_custom_call.1} parent=31 // pred_check_branch
          %254 = sbr.rel (%p252) target = $region44
        $region43: #{tpu_custom_call.1} parent=31 // pred_region
          %vm255 = vcmask 523264
          %256 = vst.msk [vmem:[#allocation2] sm:$0xff] %vm255, 0.0
        $region44: #{tpu_custom_call.1} parent=31 // pred_fallthru
          _
        %v257 = vld [vmem:[#allocation2] sm:$0xff]
        %v258 = vld [vmem:[%s217] sm:$0xff]
        %v259 = vld [vmem:[#allocation6] sm:$0xff]
        %v260 = vld [vmem:[#allocation6 + $0x8] sm:$0xff]
        %v261 = vld [vmem:[#allocation6 + $0x10] sm:$0xff]
        %v262 = vld [vmem:[#allocation6 + $0x18] sm:$0xff]
        %vm263 = vcmask 261120
        %v265 = vsel %vm263, %v258, 0
        %267 = vmatprep.subr.mxu0 0.0
        %268 = vmatpush1.msra.mxu0 0.0
        %269 = vmatprep.subr.mxu0 0.0
        %270 = vmatpush1.msra.mxu0 0.0
        %271 = vmatprep.subr.mxu0 0.0
        %272 = vmatpush1.msra.mxu0 0.0
        %273 = vmatprep.subr.mxu0 0.0
        %274 = vmatpush1.msra.mxu0 0.0
        %275 = vmatprep.subr.mxu0 0.0
        %276 = vmatpush1.msra.mxu0 0.0
        %277 = vmatprep.subr.mxu0 0.0
        %278 = vmatpush1.msra.mxu0 0.0
        %279 = vmatprep.subr.mxu0 0.0
        %280 = vmatpush1.msra.mxu0 0.0
        %281 = vmatprep.subr.mxu0 0.0
        %282 = vmatpush1.msra.mxu0 0.0
        %283 = vmatprep.subr.mxu0 0.0
        %284 = vmatpush1.msra.mxu0 0.0
        %285 = vmatprep.subr.mxu0 0.0
        %286 = vmatpush1.msra.mxu0 0.0
        %287 = vmatprep.subr.mxu0 0.0
        %288 = vmatpush1.msra.mxu0 0.0
        %289 = vmatprep.subr.mxu0 0.0
        %290 = vmatpush1.msra.mxu0 0.0
        %291 = vmatprep.subr.mxu0 0.0
        %292 = vmatpush1.msra.mxu0 %v262
        %293 = vmatprep.subr.mxu0 0.0
        %294 = vmatpush1.msra.mxu0 %v261
        %295 = vmatprep.subr.mxu0 0.0
        %296 = vmatpush1.msra.mxu0 %v260
        %297 = vmatprep.subr.mxu0 0.0
        %298 = vmatpush1.msra.mxu0 %v259
        %299 = vmatprep.subr.mxu0 0.0
        %300 = vmatpush2.msra.mxu0 0.0
        %301 = vmatprep.subr.mxu0 0.0
        %302 = vmatpush2.msra.mxu0 0.0
        %303 = vmatprep.subr.mxu0 0.0
        %304 = vmatpush2.msra.mxu0 0.0
        %305 = vmatprep.subr.mxu0 0.0
        %306 = vmatpush2.msra.mxu0 0.0
        %307 = vmatprep.subr.mxu0 0.0
        %308 = vmatpush2.msra.mxu0 0.0
        %309 = vmatprep.subr.mxu0 0.0
        %310 = vmatpush2.msra.mxu0 0.0
        %311 = vmatprep.subr.mxu0 0.0
        %312 = vmatpush2.msra.mxu0 0.0
        %313 = vmatprep.subr.mxu0 0.0
        %314 = vmatpush2.msra.mxu0 0.0
        %315 = vmatprep.subr.mxu0 0.0
        %316 = vmatpush2.msra.mxu0 0.0
        %317 = vmatprep.subr.mxu0 0.0
        %318 = vmatpush2.msra.mxu0 0.0
        %319 = vmatprep.subr.mxu0 0.0
        %320 = vmatpush2.msra.mxu0 0.0
        %321 = vmatprep.subr.mxu0 0.0
        %322 = vmatpush2.msra.mxu0 0.0
        %323 = vmatprep.subr.mxu0 0.0
        %324 = vmatpush2.msra.mxu0 0.0
        %325 = vmatprep.subr.mxu0 0.0
        %326 = vmatpush2.msra.mxu0 0.0
        %327 = vmatprep.subr.mxu0 0.0
        %328 = vmatpush2.msra.mxu0 0.0
        %329 = vmatprep.subr.mxu0 0.0
        %330 = vmatpush2.msra.mxu0 0.0
        %331 = vmatprep.mubr.f32.mxu0 0.0
        %332 = vmatmul.mubr.f32.gmra.mxu0 %v265
        %v333 = vpop.f32.mrf.mxu0
        %v334 = vadd.f32 0.0, %v333
        %v335 = vpop.f32.mrf.mxu0
        %336 = vdwg.mxu0
        %v337 = vadd.f32 %v257, %v334
        %vm338 = vcmask 523264
        %339 = vst.msk [vmem:[#allocation2] sm:$0xff] %vm338, %v337
        // Predicated region
        $region45: #{tpu_custom_call.1} parent=31 // pred_check
          %p340 = pneg %p251
        $region46: #{tpu_custom_call.1} parent=31 // pred_check_branch
          %342 = sbr.rel (%p340) target = $region48
        $region47: #{tpu_custom_call.1} parent=31 // pred_region
          %v343 = vld [vmem:[#allocation2] sm:$0xff]
          %v344 = vld [vmem:[%s250] sm:$0x1]
          %v346 = vlaneseq
          %v347 = vshrl.u32 %v346, 7
          %v348 = vsub.s32 0, %v347
          %v349 = vrot.slane %v344, %v348
          %v351 = vadd.f32 %v343, %v349
          %v352 = vmul.f32 %v351, -1.702
          %v353 = vmul.f32 %v352, 1.442695
          %v354 = vpow.pop %v353
          %v355 = vadd.f32 %v354, 1.0
          %v356 = vrcp.pop %v355
          %v357 = vmul.f32 %v351, %v356
          %358 = vst.msk [vmem:[%s246] sm:$0xff] %vm338, %v357
        $region48: #{tpu_custom_call.1} parent=31 // pred_fallthru
          _
        %s359 = sand.u32 %s132, 1
        %s360 = scalar_lea.sflag [#allocation5], %s359
        %s361 = sand.u32 %s132, 1
        %s362 = smul.addr %s361, 8
        %s363 = scalar_lea.vmem [#allocation8], %s362
        // Predicated region
        $region49: #{tpu_custom_call.1} parent=31 // pred_check
          %p364 = pneg %p142
        $region50: #{tpu_custom_call.1} parent=31 // pred_check_branch
          %366 = sbr.rel (%p364) target = $region52
        $region51: #{tpu_custom_call.1} parent=31 // pred_region
          %s368 = ssub.s32 128, 128
          %369 = vsyncadd %s360, %s368
          %s370 = sadd.s32 %s27, %s26
          %s371 = smul.addr %s370, 128
          %s372 = scalar_lea.hbm %s3, %s371
          %s374 = sshll.u32 %s363, 4
          %s375 = int_to_ptr.vmem [resolvable:$true] %s374
          %377 = dma.vmem_to_hbm [thread:$0]  %s375, 128, %s372, %s360
        $region52: #{tpu_custom_call.1} parent=31 // pred_fallthru
          _
      $region32: #{tpu_custom_call.1} parent=5 // pred_fallthru
        _
      %p378 = scmp.le.s32.totalorder 2, %s16
      // Predicated region
      $region53: #{tpu_custom_call.1} parent=5 // pred_check
        %p379 = pneg %p378
      $region54: #{tpu_custom_call.1} parent=5 // pred_check_branch
        %381 = sbr.rel (%p379) target = $region56
      $region55: #{tpu_custom_call.1} parent=5 // pred_region
        %s382 = ssub.s32 %s16, 2
        // Predicated region
        $region57: #{tpu_custom_call.1} parent=55 // pred_check
          %p383 = pneg %p148
        $region58: #{tpu_custom_call.1} parent=55 // pred_check_branch
          %385 = sbr.rel (%p383) target = $region60
        $region59: #{tpu_custom_call.1} parent=55 // pred_region
          %s386 = sand.u32 %s133, 1
          %s387 = scalar_lea.sflag [#allocation5], %s386
          %s388 = sand.u32 %s133, 1
          %s389 = smul.addr %s388, 8
          %s390 = scalar_lea.vmem [#allocation8], %s389
          %391 = dma.done %s387, 128
        $region60: #{tpu_custom_call.1} parent=55 // pred_fallthru
          _
      $region56: #{tpu_custom_call.1} parent=5 // pred_fallthru
        _
    $region6: #{tpu_custom_call.1} parent=1 // loop_footer
      %s20 = sadd.s32 1, %s16
    $region7: #{tpu_custom_call.1} parent=1 // loop_footer_branch
      %15 = sbr.rel target = $region3
    $region8: #{tpu_custom_call.1} parent=1 // loop_exit
      _
    %392 = vsyncpa [#allocation4], 1
    %s393 = scalar_lea.sflag [#allocation4], 1
    %394 = vsyncpa %s393, 1
    %395 = vsyncpa [#allocation7], 1
    %396 = vsyncpa [#allocation5], 1
    %s397 = scalar_lea.sflag [#allocation5], 1
    %398 = vsyncpa %s397, 1

</llo_original>
